<compile_context>
chip_gen: v6e
topology: v6e:2x2x1
jax: 0.10.0
libtpu: 0.0.40
codegen_flags: <defaults>
</compile_context>

<pallas_src>
import math

import jax
import jax.numpy as jnp
from jax.experimental import pallas as pl
from jax.experimental.pallas import tpu as pltpu


LANE = 128         # TPU lane width: pad feature dims to multiples of this.
SUBLANE = 8        # f32 sublane count: batch tiles must be multiples of this.
TILE_B_MAX = 1024  # batch tile (rows per grid step) for large batches.


def _round_up(n, m):
    return ((n + m - 1) // m) * m


def _fused_linear_kernel(x_ref, w_ref, b_ref, o_ref):
    # Single GEMM (folded fc1∘fc2∘fc3): f32 MXU accumulate + f32 bias add.
    out = jnp.dot(x_ref[...], w_ref[...], preferred_element_type=jnp.float32)
    out = out + b_ref[...]            # (1, OUT_P) broadcasts over rows
    o_ref[...] = out.astype(o_ref.dtype)


def init_params(key, in_features, hidden1, hidden2, out_features):
    """torch.nn.Linear-style init (uniform +/- 1/sqrt(fan_in)).

    Weights are produced in (in, out) layout (W^T of PyTorch's (out, in)
    storage); biases as (1, out) rows.
    """
    def linear(key, fan_in, fan_out):
        kw, kb = jax.random.split(key)
        bound = 1.0 / math.sqrt(fan_in)
        w = jax.random.uniform(kw, (fan_in, fan_out), jnp.float32, -bound, bound)
        b = jax.random.uniform(kb, (1, fan_out), jnp.float32, -bound, bound)
        return w, b

    k1, k2, k3 = jax.random.split(key, 3)
    w1, b1 = linear(k1, in_features, hidden1)
    w2, b2 = linear(k2, hidden1, hidden2)
    w3, b3 = linear(k3, hidden2, out_features)
    return {"w1": w1, "b1": b1, "w2": w2, "b2": b2, "w3": w3, "b3": b3}


def fold_and_pad_params(params):
    """Fold the activation-free 3-layer chain into one (W, b), then zero-pad
    feature dims to 128 lanes.

    Fold (exact modulo f32 rounding since there are no nonlinearities):
        y = ((x@W1 + b1)@W2 + b2)@W3 + b3 = x @ (W1@W2@W3) + ((b1@W2 + b2)@W3 + b3)

    Zero padding is exact: padded input columns multiply zero weight rows,
    padded output columns get zero weights + zero bias.
    """
    w1, b1 = params["w1"], params["b1"]
    w2, b2 = params["w2"], params["b2"]
    w3, b3 = params["w3"], params["b3"]

    # Fold in f32 (done once at prep time, outside the kernel).
    w = w1 @ w2 @ w3                       # (in_f, out_f)
    b = (b1 @ w2 + b2) @ w3 + b3           # (1, out_f)

    in_f, out_f = w.shape
    in_p = _round_up(in_f, LANE)
    out_p = _round_up(out_f, LANE)

    w_p = jnp.pad(w, ((0, in_p - in_f), (0, out_p - out_f)))
    b_p = jnp.pad(b, ((0, 0), (0, out_p - out_f)))

    padded = {"w": w_p, "b": b_p}
    meta = {"in_f": in_f, "out_f": out_f, "in_p": in_p, "out_p": out_p}
    return padded, meta


def sign_language_net_forward(x, padded_params, meta):
    """Fused SignLanguageNet forward.  x: (B, in_features) float32."""
    B, in_f = x.shape
    in_p, out_p, out_f = meta["in_p"], meta["out_p"], meta["out_f"]

    # Batch tile: small batches use one sublane-aligned tile, large batches
    # stream TILE_B_MAX rows per grid step (multiple of 128 -> full MXU fill
    # in the M dim on v5e's 128-tall arrays as well).
    b_sub = _round_up(B, SUBLANE)
    tile_b = b_sub if b_sub < TILE_B_MAX else TILE_B_MAX
    b_pad = _round_up(B, tile_b)
    n_steps = b_pad // tile_b

    # Pad x: zero rows (sliced off later) and zero feature columns (exact).
    x_p = jnp.pad(x, ((0, b_pad - B), (0, in_p - in_f)))

    p = padded_params
    flops = 2 * b_pad * in_p * out_p
    bytes_accessed = 4 * (b_pad * in_p + b_pad * out_p + in_p * out_p + out_p)

    # VMEM budget: double-buffered x/out tiles + (double-buffered) resident
    # W/b + headroom.  Explicit so the tiling is valid on v7x's 64 MiB VMEM
    # (32 MiB default scoped) as well as v5e/v6e's 128 MiB.
    vmem_bytes = 4 * (3 * tile_b * in_p + 3 * tile_b * out_p
                      + 2 * (in_p * out_p + out_p)) + (4 << 20)
    vmem_bytes = min(_round_up(vmem_bytes, 1 << 20), 32 << 20)

    resident = lambda i: (0, 0)   # W / b: same block every grid step

    out_padded = pl.pallas_call(
        _fused_linear_kernel,
        out_shape=jax.ShapeDtypeStruct((b_pad, out_p), x.dtype),
        grid_spec=pltpu.PrefetchScalarGridSpec(
            num_scalar_prefetch=0,
            grid=(n_steps,),
            in_specs=[
                pl.BlockSpec((tile_b, in_p), lambda i: (i, 0)),   # x tile
                pl.BlockSpec((in_p, out_p), resident),            # folded W
                pl.BlockSpec((1, out_p), resident),               # folded b
            ],
            out_specs=pl.BlockSpec((tile_b, out_p), lambda i: (i, 0)),
        ),
        compiler_params=pltpu.CompilerParams(
            dimension_semantics=("parallel",),
            vmem_limit_bytes=vmem_bytes,
        ),
        cost_estimate=pl.CostEstimate(
            flops=flops, transcendentals=0, bytes_accessed=bytes_accessed),
    )(x_p, p["w"], p["b"])

    # Slice back the real batch rows and output columns.
    # TODO(synk): on v5e at very large B, benchmark an unpadded out_f-wide
    # output block vs this lane-dense out_p=128 one (8x less HBM writeback).
    return out_padded[:B, :out_f]


def reference_forward(x, p):
    """Unfused reference = exact module semantics (fc1 -> fc2 -> fc3)."""
    h1 = x @ p["w1"] + p["b1"]
    h2 = h1 @ p["w2"] + p["b2"]
    return h2 @ p["w3"] + p["b3"]


if __name__ == "__main__":
    # Small shapes consistent with the module: batch=8, in=32, h1=64, h2=64, out=16.
    # (At these shapes the kernel is pure launch/DMA overhead; the tiling and
    # fold above only pay off once B is in the thousands.)
    B, IN_F, H1, H2, OUT_F = 8, 32, 64, 64, 16

    key = jax.random.PRNGKey(0)
    k_x, k_p = jax.random.split(key)

    x = jax.random.normal(k_x, (B, IN_F), dtype=jnp.float32)
    params = init_params(k_p, IN_F, H1, H2, OUT_F)
    padded_params, meta = fold_and_pad_params(params)

    fwd = jax.jit(lambda xx: sign_language_net_forward(xx, padded_params, meta))
    out = fwd(x)
    out = jax.block_until_ready(out)

    ref = reference_forward(x, params)
    assert out.shape == (B, OUT_F)
    assert jnp.allclose(out, ref, atol=1e-4, rtol=1e-4), "mismatch vs reference"

    print("KERNEL_OK")
</pallas_src>

<mosaic_0001>
module attributes {stable_mosaic.version = 11 : i64} {
  func.func @_fused_linear_kernel(%arg0: i32, %arg1: memref<8x128xf32, #tpu.memory_space<vmem>>, %arg2: memref<128x128xf32, #tpu.memory_space<vmem>>, %arg3: memref<1x128xf32, #tpu.memory_space<vmem>>, %arg4: memref<8x128xf32, #tpu.memory_space<vmem>>) attributes {dimension_semantics = [#tpu.dimension_semantics<parallel>], iteration_bounds = array<i64: 1>, scalar_prefetch = 0 : i64, scratch_operands = 0 : i64, tpu.core_type = #tpu.core_type<tc>, window_params = [{transform_indices = @transform_0, window_bounds = array<i64: 8, 128>}, {pipeline_mode = #tpu.pipeline_mode<synchronous>, transform_indices = @transform_1, window_bounds = array<i64: 128, 128>}, {pipeline_mode = #tpu.pipeline_mode<synchronous>, transform_indices = @transform_2, window_bounds = array<i64: 1, 128>}, {transform_indices = @transform_3, window_bounds = array<i64: 8, 128>}]} {
    %c0 = arith.constant 0 : index
    %c0_0 = arith.constant 0 : index
    %0 = vector.load %arg1[%c0, %c0_0] : memref<8x128xf32, #tpu.memory_space<vmem>>, vector<8x128xf32>
    %c0_1 = arith.constant 0 : index
    %c0_2 = arith.constant 0 : index
    %1 = vector.load %arg2[%c0_1, %c0_2] : memref<128x128xf32, #tpu.memory_space<vmem>>, vector<128x128xf32>
    %cst = arith.constant dense<0.000000e+00> : vector<8x128xf32>
    %2 = tpu.matmul %0, %1, %cst {dimension_numbers = #tpu.dot_dimension_numbers<[1], [0], [0], [1], [0, 0, 1, 1], [], []>} : vector<8x128xf32>, vector<128x128xf32>, vector<8x128xf32> -> vector<8x128xf32>
    %c0_3 = arith.constant 0 : index
    %c0_4 = arith.constant 0 : index
    %3 = vector.load %arg3[%c0_3, %c0_4] : memref<1x128xf32, #tpu.memory_space<vmem>>, vector<1x128xf32>
    %4 = vector.broadcast %3 : vector<1x128xf32> to vector<8x128xf32>
    %5 = arith.addf %2, %4 : vector<8x128xf32>
    %c0_5 = arith.constant 0 : index
    %c0_6 = arith.constant 0 : index
    %6 = vector.load %arg4[%c0_5, %c0_6] : memref<8x128xf32, #tpu.memory_space<vmem>>, vector<8x128xf32>
    tpu.vector_store %arg4[%c0_5, %c0_6], %5 {strides = array<i32>} : memref<8x128xf32, #tpu.memory_space<vmem>>, vector<8x128xf32>,
    return
  }
  func.func @transform_0(%arg0: i32) -> (i32, i32) {
    %c0_i32 = arith.constant 0 : i32
    %c0_i32_0 = arith.constant 0 : i32
    return %arg0, %c0_i32 : i32, i32
  }
  func.func @transform_1(%arg0: i32) -> (i32, i32) {
    %c0_i32 = arith.constant 0 : i32
    %c0_i32_0 = arith.constant 0 : i32
    %c0_i32_1 = arith.constant 0 : i32
    return %c0_i32, %c0_i32_0 : i32, i32
  }
  func.func @transform_2(%arg0: i32) -> (i32, i32) {
    %c0_i32 = arith.constant 0 : i32
    %c0_i32_0 = arith.constant 0 : i32
    %c0_i32_1 = arith.constant 0 : i32
    return %c0_i32, %c0_i32_0 : i32, i32
  }
  func.func @transform_3(%arg0: i32) -> (i32, i32) {
    %c0_i32 = arith.constant 0 : i32
    %c0_i32_0 = arith.constant 0 : i32
    return %arg0, %c0_i32 : i32, i32
  }
}

</mosaic_0001>

<llo_original>
// kernel: _lambda_.1
$region0: #{_lambda_.1}
  #allocation0 [shape = 'u32[]', space=smem, size = 0x4, offset = 0x4, fixed_abs, tag = 'smem constant byte address 0x4 - core index']
  #allocation1 [shape = 'u32[144,128]{1,0:T(1,128)}', space=vmem, size = 0x12000, scoped, tag = 'internal scratch']
  %s0 = inlined_call_operand.vmem [shape: f32[8,128], index: 0, kind: input, shape index: {}]
  %s1 = inlined_call_operand.hbm [shape: f32[128,128], index: 1, kind: input, shape index: {}]
  %s2 = inlined_call_operand.vmem [shape: f32[1,128], index: 2, kind: input, shape index: {}]
  %s3 = inlined_call_operand.hbm [shape: f32[8,128], index: 3, kind: output, shape index: {}]
  %s4 = sld [smem:[#allocation0]]
  $region26: #{_lambda_.1} parent=0
    _
  %s6 = ssub.s32 1, %s4
  %s7 = scalar_select 0, %s6, %s4
  $region1: #{_lambda_.1} parent=0
    #allocation2 [shape = 'u8[65536]{0}', space=vmem, size = 0x10000, scoped, tag = 'input window, operand 1, single buffered']
    #allocation3 [shape = 's32[1]{0}', space=sflag, size = 0x4, scoped, tag = 'scoped memory for _lambda_.1']
    #allocation4 [shape = 's32[1]{0}', space=sflag, size = 0x4, scoped, tag = 'scoped memory for _lambda_.1']
    #allocation5 [shape = 'u8[4096]{0}', space=vmem, size = 0x1000, scoped, tag = 'output window, operand 0, single buffered']
    %8 = vsyncpa [#allocation3], 0
    %9 = vsyncpa [#allocation4], 0
    // Predicated region
    $region2: #{_lambda_.1} parent=1 // pred_check
      _
    $region3: #{_lambda_.1} parent=1 // pred_check_branch
      %11 = sbr.rel (0) target = $region5
    $region4: #{_lambda_.1} parent=1 // pred_region
      _
    $region5: #{_lambda_.1} parent=1 // pred_fallthru
      _
    // Predicated region
    $region6: #{_lambda_.1} parent=1 // pred_check
      _
    $region7: #{_lambda_.1} parent=1 // pred_check_branch
      %13 = sbr.rel (0) target = $region9
    $region8: #{_lambda_.1} parent=1 // pred_region
      %s15 = ssub.s32 2048, 2048
      %16 = vsyncadd [#allocation3], %s15
      %s17 = sshll.u32 [#allocation2], 4
      %s18 = int_to_ptr.vmem [resolvable:$true] %s17
      %23 = dma.hbm_to_vmem [thread:$0]  %s1, 2048, %s18, [#allocation3], 128, 128, 8
    $region9: #{_lambda_.1} parent=1 // pred_fallthru
      _
    // Predicated region
    $region10: #{_lambda_.1} parent=1 // pred_check
      _
    $region11: #{_lambda_.1} parent=1 // pred_check_branch
      %25 = sbr.rel (0) target = $region13
    $region12: #{_lambda_.1} parent=1 // pred_region
      _
    $region13: #{_lambda_.1} parent=1 // pred_fallthru
      _
    // Predicated region
    $region14: #{_lambda_.1} parent=1 // pred_check
      _
    $region15: #{_lambda_.1} parent=1 // pred_check_branch
      %27 = sbr.rel (0) target = $region17
    $region16: #{_lambda_.1} parent=1 // pred_region
      %28 = dma.done [#allocation3], 2048
    $region17: #{_lambda_.1} parent=1 // pred_fallthru
      _
    %v29 = vld [vmem:[%s0] sm:$0xff]
    %v30 = vld [vmem:[#allocation2] sm:$0xff]
    %v31 = vld [vmem:[#allocation2 + $0x8] sm:$0xff]
    %v32 = vld [vmem:[#allocation2 + $0x10] sm:$0xff]
    %v33 = vld [vmem:[#allocation2 + $0x18] sm:$0xff]
    %v34 = vld [vmem:[#allocation2 + $0x20] sm:$0xff]
    %v35 = vld [vmem:[#allocation2 + $0x28] sm:$0xff]
    %v36 = vld [vmem:[#allocation2 + $0x30] sm:$0xff]
    %v37 = vld [vmem:[#allocation2 + $0x38] sm:$0xff]
    %v38 = vld [vmem:[#allocation2 + $0x40] sm:$0xff]
    %v39 = vld [vmem:[#allocation2 + $0x48] sm:$0xff]
    %v40 = vld [vmem:[#allocation2 + $0x50] sm:$0xff]
    %v41 = vld [vmem:[#allocation2 + $0x58] sm:$0xff]
    %v42 = vld [vmem:[#allocation2 + $0x60] sm:$0xff]
    %v43 = vld [vmem:[#allocation2 + $0x68] sm:$0xff]
    %v44 = vld [vmem:[#allocation2 + $0x70] sm:$0xff]
    %v45 = vld [vmem:[#allocation2 + $0x78] sm:$0xff]
    %v46 = vld [vmem:[%s2] sm:$0x1]
    %v48 = vlaneseq
    %v49 = vshrl.u32 %v48, 7
    %v50 = vsub.s32 0, %v49
    %v51 = vrot.slane %v46, %v50
    %53 = vmatprep.subr.mxu0 0.0
    %54 = vmatpush1.msra.mxu0 %v45
    %55 = vmatprep.subr.mxu0 0.0
    %56 = vmatpush1.msra.mxu0 %v44
    %57 = vmatprep.subr.mxu0 0.0
    %58 = vmatpush1.msra.mxu0 %v43
    %59 = vmatprep.subr.mxu0 0.0
    %60 = vmatpush1.msra.mxu0 %v42
    %61 = vmatprep.subr.mxu0 0.0
    %62 = vmatpush1.msra.mxu0 %v41
    %63 = vmatprep.subr.mxu0 0.0
    %64 = vmatpush1.msra.mxu0 %v40
    %65 = vmatprep.subr.mxu0 0.0
    %66 = vmatpush1.msra.mxu0 %v39
    %67 = vmatprep.subr.mxu0 0.0
    %68 = vmatpush1.msra.mxu0 %v38
    %69 = vmatprep.subr.mxu0 0.0
    %70 = vmatpush1.msra.mxu0 %v37
    %71 = vmatprep.subr.mxu0 0.0
    %72 = vmatpush1.msra.mxu0 %v36
    %73 = vmatprep.subr.mxu0 0.0
    %74 = vmatpush1.msra.mxu0 %v35
    %75 = vmatprep.subr.mxu0 0.0
    %76 = vmatpush1.msra.mxu0 %v34
    %77 = vmatprep.subr.mxu0 0.0
    %78 = vmatpush1.msra.mxu0 %v33
    %79 = vmatprep.subr.mxu0 0.0
    %80 = vmatpush1.msra.mxu0 %v32
    %81 = vmatprep.subr.mxu0 0.0
    %82 = vmatpush1.msra.mxu0 %v31
    %83 = vmatprep.subr.mxu0 0.0
    %84 = vmatpush1.msra.mxu0 %v30
    %85 = vmatprep.subr.mxu0 0.0
    %86 = vmatpush2.msra.mxu0 0.0
    %87 = vmatprep.subr.mxu0 0.0
    %88 = vmatpush2.msra.mxu0 0.0
    %89 = vmatprep.subr.mxu0 0.0
    %90 = vmatpush2.msra.mxu0 0.0
    %91 = vmatprep.subr.mxu0 0.0
    %92 = vmatpush2.msra.mxu0 0.0
    %93 = vmatprep.subr.mxu0 0.0
    %94 = vmatpush2.msra.mxu0 0.0
    %95 = vmatprep.subr.mxu0 0.0
    %96 = vmatpush2.msra.mxu0 0.0
    %97 = vmatprep.subr.mxu0 0.0
    %98 = vmatpush2.msra.mxu0 0.0
    %99 = vmatprep.subr.mxu0 0.0
    %100 = vmatpush2.msra.mxu0 0.0
    %101 = vmatprep.subr.mxu0 0.0
    %102 = vmatpush2.msra.mxu0 0.0
    %103 = vmatprep.subr.mxu0 0.0
    %104 = vmatpush2.msra.mxu0 0.0
    %105 = vmatprep.subr.mxu0 0.0
    %106 = vmatpush2.msra.mxu0 0.0
    %107 = vmatprep.subr.mxu0 0.0
    %108 = vmatpush2.msra.mxu0 0.0
    %109 = vmatprep.subr.mxu0 0.0
    %110 = vmatpush2.msra.mxu0 0.0
    %111 = vmatprep.subr.mxu0 0.0
    %112 = vmatpush2.msra.mxu0 0.0
    %113 = vmatprep.subr.mxu0 0.0
    %114 = vmatpush2.msra.mxu0 0.0
    %115 = vmatprep.subr.mxu0 0.0
    %116 = vmatpush2.msra.mxu0 0.0
    %117 = vmatprep.mubr.f32.mxu0 0.0
    %118 = vmatmul.mubr.f32.gmra.mxu0 %v29
    %v119 = vpop.f32.mrf.mxu0
    %v120 = vadd.f32 %v51, %v119
    %v121 = vpop.f32.mrf.mxu0
    %122 = vdwg.mxu0
    %123 = vst [vmem:[#allocation5] sm:$0xff] %v120
    // Predicated region
    $region18: #{_lambda_.1} parent=1 // pred_check
      _
    $region19: #{_lambda_.1} parent=1 // pred_check_branch
      %125 = sbr.rel (0) target = $region21
    $region20: #{_lambda_.1} parent=1 // pred_region
      %s127 = ssub.s32 128, 128
      %128 = vsyncadd [#allocation4], %s127
      %s130 = sshll.u32 [#allocation5], 4
      %s131 = int_to_ptr.vmem [resolvable:$true] %s130
      %133 = dma.vmem_to_hbm [thread:$0]  %s131, 128, %s3, [#allocation4]
    $region21: #{_lambda_.1} parent=1 // pred_fallthru
      _
    // Predicated region
    $region22: #{_lambda_.1} parent=1 // pred_check
      _
    $region23: #{_lambda_.1} parent=1 // pred_check_branch
      %135 = sbr.rel (0) target = $region25
    $region24: #{_lambda_.1} parent=1 // pred_region
      %136 = dma.done [#allocation4], 128
    $region25: #{_lambda_.1} parent=1 // pred_fallthru
      _
    %137 = vsyncpa [#allocation3], 1
    %138 = vsyncpa [#allocation4], 1

</llo_original>
